<compile_context>
chip_gen: v5e
topology: v5e:2x2
jax: 0.10.0
libtpu: 0.0.40
codegen_flags: <defaults>
</compile_context>

<pallas_src>
import jax
import jax.numpy as jnp
from jax.experimental import pallas as pl
from jax.experimental.pallas import tpu as pltpu


def _fused_conv1x1_bn_relu_kernel(x_ref, w_ref, shift_ref, o_ref):
    # x_ref:     (C_in, tn)   spatial tile of one batch element, channel-major
    # w_ref:     (C_out, C_in) folded weight  = conv_w * bn_scale[:, None]   (bf16)
    # shift_ref: (C_out, 1)    folded shift   = bn_beta + bn_scale*(conv_b - bn_mean)
    # o_ref:     (C_out, tn)
    x = x_ref[...].astype(w_ref.dtype)          # cast under the DMA (free-ish VPU op)
    y = jnp.dot(w_ref[...], x, preferred_element_type=jnp.float32)
    y = y + shift_ref[...]
    o_ref[...] = jnp.maximum(y, 0.0).astype(o_ref.dtype)


def vcnet12_block_tail(att_feat_nchw, conv_w, conv_b, bn_gamma, bn_beta,
                       bn_mean, bn_var, *, eps=1e-5, max_tn=4096,
                       compute_dtype=jnp.bfloat16, out_dtype=jnp.bfloat16,
                       vmem_tile_budget_bytes=12 * 1024 * 1024):
    """Fused upsamp(1x1 conv) + BatchNorm2d(eval) + ReLU + Dropout(eval=identity).

    att_feat_nchw: (B, C_in, H, W) any float dtype (bf16 recommended upstream)
    conv_w:        (C_out, C_in)   (torch Conv2d weight (C_out, C_in, 1, 1) squeezed)
    conv_b:        (C_out,)
    bn_*:          (C_out,)
    returns:       (B, C_out, H, W) in out_dtype (default bf16 -> halves output
                   HBM traffic; pass out_dtype=jnp.float32 if downstream needs it).
    """
    B, C_in, H, W = att_feat_nchw.shape
    C_out = conv_w.shape[0]
    HW = H * W

    # NCHW-native flatten: (B, C_in, HW). Contiguous reshape -> no data movement.
    # NOTE: no dtype cast here (wrapper astype would be an extra full HBM pass).
    x3d = att_feat_nchw.reshape(B, C_in, HW)

    # Lane-dense output: pad tiny feature maps up to one full 128-lane tile so
    # stores are unmasked vst (biggest single lever on the store-bound tail).
    HW_k = HW
    if HW < 128:
        HW_k = 128
        x3d = jnp.pad(x3d, ((0, 0), (0, 0), (0, HW_k - HW)))

    # Fold conv bias + BN (eval mode, running stats) into weight and one shift.
    scale = bn_gamma.astype(jnp.float32) / jnp.sqrt(bn_var.astype(jnp.float32) + eps)
    w_folded = (conv_w.astype(jnp.float32) * scale[:, None]).astype(compute_dtype)
    shift_col = (bn_beta.astype(jnp.float32)
                 + scale * (conv_b.astype(jnp.float32)
                            - bn_mean.astype(jnp.float32))).reshape(C_out, 1)

    # --- tile-size selection (VMEM-budgeted, lane-aligned) ---------------------
    x_bytes = jnp.dtype(x3d.dtype).itemsize
    o_bytes = jnp.dtype(out_dtype).itemsize
    # double-buffered input tile + double-buffered output tile, per lane column
    per_lane = 2 * (C_in * x_bytes + C_out * o_bytes)
    tn_vmem = max(128, (vmem_tile_budget_bytes // per_lane) // 128 * 128)
    tn = min(max_tn, tn_vmem)
    tn = min(tn, max(128, (HW_k // 128) * 128))   # never exceed the (padded) map

    # v7x megacore: make sure the parallel grid has >= 2 steps so both
    # TensorCores get work on small-batch inference.
    if B * pl.cdiv(HW_k, tn) < 2 and HW_k >= 256:
        tn_half = max(128, (HW_k // 2) // 128 * 128)
        tn = min(tn, tn_half)

    grid = (B, pl.cdiv(HW_k, tn))

    cost = pl.CostEstimate(
        flops=2 * B * HW_k * C_in * C_out,
        transcendentals=0,
        bytes_accessed=(B * C_in * HW_k * x_bytes
                        + B * C_out * HW_k * o_bytes
                        + C_out * C_in * jnp.dtype(compute_dtype).itemsize
                        + C_out * 4),
    )

    out3d = pl.pallas_call(
        _fused_conv1x1_bn_relu_kernel,
        out_shape=jax.ShapeDtypeStruct((B, C_out, HW_k), out_dtype),
        grid_spec=pltpu.PrefetchScalarGridSpec(
            num_scalar_prefetch=0,
            grid=grid,
            in_specs=[
                # Batch dim squeezed out of the kernel ref; stream spatial tiles.
                pl.BlockSpec((None, C_in, tn), lambda b, j: (b, 0, j)),
                # Weight and shift stay resident (constant index_map).
                pl.BlockSpec((C_out, C_in), lambda b, j: (0, 0)),
                pl.BlockSpec((C_out, 1), lambda b, j: (0, 0)),
            ],
            out_specs=pl.BlockSpec((None, C_out, tn), lambda b, j: (b, 0, j)),
        ),
        compiler_params=pltpu.CompilerParams(
            dimension_semantics=("parallel", "parallel"),
            vmem_limit_bytes=32 * 1024 * 1024),
        cost_estimate=cost,
    )(x3d, w_folded, shift_col)

    if HW_k != HW:
        out3d = out3d[:, :, :HW]
    # Free contiguous reshape back to NCHW.
    return out3d.reshape(B, C_out, H, W)


def _reference(att_feat_nchw_f32, conv_w, conv_b, bn_gamma, bn_beta, bn_mean,
               bn_var, eps=1e-5):
    # Pure-JAX f32 reference of the same math (1x1 conv + BN eval + ReLU).
    y = jnp.einsum('oc,bchw->bohw', conv_w, att_feat_nchw_f32)
    y = y + conv_b[None, :, None, None]
    scale = bn_gamma / jnp.sqrt(bn_var + eps)
    shift = bn_beta - bn_mean * scale
    y = y * scale[None, :, None, None] + shift[None, :, None, None]
    return jnp.maximum(y, 0.0)


if __name__ == "__main__":
    # Small shapes consistent with the module: feat_channels=128 (stand-in for 640),
    # so the "upsamp" conv maps feat_channels//4 = 32 -> 128 channels.
    B, H, W = 2, 16, 16
    feat_channels = 128
    C_in = feat_channels // 4
    C_out = feat_channels

    key = jax.random.PRNGKey(0)
    k_x, k_w, k_b, k_g, k_be, k_m, k_v = jax.random.split(key, 7)

    # Upstream transformer stage typically emits bf16 -> exercise the bf16 path.
    att_feat = jax.random.normal(k_x, (B, C_in, H, W), dtype=jnp.float32)
    att_feat_bf16 = att_feat.astype(jnp.bfloat16)

    # Deterministic synthetic parameters (shapes match nn.Conv2d / nn.BatchNorm2d).
    conv_w = jax.random.normal(k_w, (C_out, C_in), dtype=jnp.float32) * 0.05
    conv_b = jax.random.normal(k_b, (C_out,), dtype=jnp.float32) * 0.01
    bn_gamma = 1.0 + 0.1 * jax.random.normal(k_g, (C_out,), dtype=jnp.float32)
    bn_beta = 0.1 * jax.random.normal(k_be, (C_out,), dtype=jnp.float32)
    bn_mean = 0.05 * jax.random.normal(k_m, (C_out,), dtype=jnp.float32)
    bn_var = jnp.abs(jax.random.normal(k_v, (C_out,), dtype=jnp.float32)) + 0.5

    out = vcnet12_block_tail(att_feat_bf16, conv_w, conv_b, bn_gamma, bn_beta,
                             bn_mean, bn_var)
    out = jax.block_until_ready(out)

    # Reference in f32 on the bf16-rounded input (so tolerance only covers the
    # in-kernel bf16 weight/output rounding).
    ref = _reference(att_feat_bf16.astype(jnp.float32), conv_w, conv_b,
                     bn_gamma, bn_beta, bn_mean, bn_var)
    assert out.shape == (B, C_out, H, W)
    assert out.dtype == jnp.bfloat16
    assert jnp.allclose(out.astype(jnp.float32), ref, atol=3e-2, rtol=3e-2), \
        "mismatch vs reference"

    print("KERNEL_OK")
</pallas_src>

<mosaic_0001>
module attributes {stable_mosaic.version = 11 : i64} {
  func.func @_fused_conv1x1_bn_relu_kernel(%arg0: i32, %arg1: i32, %arg2: memref<1x32x256xbf16, #tpu.memory_space<vmem>>, %arg3: memref<128x32xbf16, #tpu.memory_space<vmem>>, %arg4: memref<128x1xf32, #tpu.memory_space<vmem>>, %arg5: memref<1x128x256xbf16, #tpu.memory_space<vmem>>) attributes {dimension_semantics = [#tpu.dimension_semantics<parallel>, #tpu.dimension_semantics<parallel>], iteration_bounds = array<i64: 2, 1>, scalar_prefetch = 0 : i64, scratch_operands = 0 : i64, tpu.core_type = #tpu.core_type<tc>, window_params = [{transform_indices = @transform_0, window_bounds = array<i64: 1, 32, 256>}, {pipeline_mode = #tpu.pipeline_mode<synchronous>, transform_indices = @transform_1, window_bounds = array<i64: 128, 32>}, {pipeline_mode = #tpu.pipeline_mode<synchronous>, transform_indices = @transform_2, window_bounds = array<i64: 128, 1>}, {transform_indices = @transform_3, window_bounds = array<i64: 1, 128, 256>}]} {
    %c0 = arith.constant 0 : index
    %c0_0 = arith.constant 0 : index
    %c0_1 = arith.constant 0 : index
    %0 = vector.load %arg2[%c0, %c0_0, %c0_1] : memref<1x32x256xbf16, #tpu.memory_space<vmem>>, vector<1x32x256xbf16>
    %1 = vector.shape_cast %0 : vector<1x32x256xbf16> to vector<32x256xbf16>
    %c0_2 = arith.constant 0 : index
    %c0_3 = arith.constant 0 : index
    %2 = vector.load %arg3[%c0_2, %c0_3] : memref<128x32xbf16, #tpu.memory_space<vmem>>, vector<128x32xbf16>
    %cst = arith.constant dense<0.000000e+00> : vector<128x256xf32>
    %3 = tpu.matmul %2, %1, %cst {dimension_numbers = #tpu.dot_dimension_numbers<[1], [0], [0], [1], [0, 0, 1, 1], [], []>} : vector<128x32xbf16>, vector<32x256xbf16>, vector<128x256xf32> -> vector<128x256xf32>
    %c0_4 = arith.constant 0 : index
    %c0_5 = arith.constant 0 : index
    %4 = vector.load %arg4[%c0_4, %c0_5] : memref<128x1xf32, #tpu.memory_space<vmem>>, vector<128x1xf32>
    %5 = vector.broadcast %4 : vector<128x1xf32> to vector<128x256xf32>
    %6 = arith.addf %3, %5 : vector<128x256xf32>
    %cst_6 = arith.constant 0.000000e+00 : f32
    %7 = vector.broadcast %cst_6 : f32 to vector<128x256xf32>
    %8 = arith.maximumf %6, %7 : vector<128x256xf32>
    %9 = arith.truncf %8 : vector<128x256xf32> to vector<128x256xbf16>
    %c0_7 = arith.constant 0 : index
    %c0_8 = arith.constant 0 : index
    %c0_9 = arith.constant 0 : index
    %10 = vector.load %arg5[%c0_7, %c0_8, %c0_9] : memref<1x128x256xbf16, #tpu.memory_space<vmem>>, vector<1x128x256xbf16>
    %11 = vector.shape_cast %10 : vector<1x128x256xbf16> to vector<128x256xbf16>
    %12 = vector.shape_cast %9 : vector<128x256xbf16> to vector<1x128x256xbf16>
    tpu.vector_store %arg5[%c0_7, %c0_8, %c0_9], %12 {strides = array<i32>} : memref<1x128x256xbf16, #tpu.memory_space<vmem>>, vector<1x128x256xbf16>,
    return
  }
  func.func @transform_0(%arg0: i32, %arg1: i32) -> (i32, i32, i32) {
    %c0_i32 = arith.constant 0 : i32
    %c0_i32_0 = arith.constant 0 : i32
    return %arg0, %c0_i32, %arg1 : i32, i32, i32
  }
  func.func @transform_1(%arg0: i32, %arg1: i32) -> (i32, i32) {
    %c0_i32 = arith.constant 0 : i32
    %c0_i32_0 = arith.constant 0 : i32
    %c0_i32_1 = arith.constant 0 : i32
    return %c0_i32, %c0_i32_0 : i32, i32
  }
  func.func @transform_2(%arg0: i32, %arg1: i32) -> (i32, i32) {
    %c0_i32 = arith.constant 0 : i32
    %c0_i32_0 = arith.constant 0 : i32
    %c0_i32_1 = arith.constant 0 : i32
    return %c0_i32, %c0_i32_0 : i32, i32
  }
  func.func @transform_3(%arg0: i32, %arg1: i32) -> (i32, i32, i32) {
    %c0_i32 = arith.constant 0 : i32
    %c0_i32_0 = arith.constant 0 : i32
    return %arg0, %c0_i32, %arg1 : i32, i32, i32
  }
}

</mosaic_0001>

<llo_original>
// kernel: tpu_custom_call.1
$region0: #{tpu_custom_call.1}
  #allocation0 [shape = 'u32[]', space=smem, size = 0x4, offset = 0x4, fixed_abs, tag = 'smem constant byte address 0x4 - core index']
  #allocation1 [shape = 'u32[72,128]{1,0:T(1,128)}', space=vmem, size = 0x9000, scoped, tag = 'internal scratch']
  %s0 = inlined_call_operand.vmem [shape: bf16[2,32,256], index: 0, kind: input, shape index: {}]
  %s1 = inlined_call_operand.vmem [shape: bf16[128,32], index: 1, kind: input, shape index: {}]
  %s2 = inlined_call_operand.vmem [shape: f32[128,1], index: 2, kind: input, shape index: {}]
  %s3 = inlined_call_operand.hbm [shape: bf16[2,128,256], index: 3, kind: output, shape index: {}]
  %s4 = sld [smem:[#allocation0]]
  $region45: #{tpu_custom_call.1} parent=0
    _
  %s6 = ssub.s32 1, %s4
  %s7 = scalar_select 0, %s6, %s4
  $region1: #{tpu_custom_call.1} parent=0
    #allocation2 [shape = 'u8[131072]{0}', space=vmem, size = 0x20000, scoped, tag = 'output window, operand 0']
    #allocation3 [shape = 's32[2]{0}', space=sflag, size = 0x8, scoped, tag = 'scoped memory for tpu_custom_call.1']
    %8 = vsyncpa [#allocation3], 0
    %s9 = scalar_lea.sflag [#allocation3], 1
    %10 = vsyncpa %s9, 0
    loop: start=0, step=1, limit=4
    $region2: #{tpu_custom_call.1} parent=1 // loop_pre_header
      _
    $region3: #{tpu_custom_call.1} parent=1 // loop_header
      %s12 = sphi 0, %s16
      %p13 = scmp.ge.s32.totalorder %s12, 4
      %s19 = sphi 0, %s31
      %s20 = sphi 0, %s27
      %s21 = sphi 0, %s19
      %s22 = sphi 0, %s20
      %s23 = sphi 0, %s21
      %s24 = sphi 0, %s22
      %s36 = sphi 0, %s38
      %s39 = sphi 0, %s36
      %s40 = sphi 0, %s39
      %s56 = sphi 0, %s40
      %s60 = sphi 0, %s60
      %s62 = sphi 0, %s60
      %s63 = sphi 0, %s62
      %s77 = sphi 0, %s63
      %s81 = sphi 0, %s81
      %s83 = sphi 0, %s81
      %s84 = sphi 0, %s83
      %s98 = sphi 0, %s84
      %s106 = sphi 0, %s108
      %s109 = sphi 0, %s106
      %s110 = sphi 0, %s109
      %s126 = sphi 0, %s110
    $region4: #{tpu_custom_call.1} parent=1 // loop_header_branch
      %15 = sbr.rel (%p13) target = $region8
    $region5: #{tpu_custom_call.1} parent=1 // loop_body
      %s17 = ssub.s32 %s12, 1
      %s18 = ssub.s32 %s12, 2
      %s25 = sadd.s32 1, %s20
      %p26 = scmp.ge.s32.totalorder %s25, 1
      %s27 = scalar_select %p26, 0, %s25
      %s28 = sadd.s32 1, %s19
      %s29 = scalar_select %p26, %s28, %s19
      %p30 = scmp.ge.s32.totalorder %s29, 2
      %s31 = scalar_select %p30, 0, %s29
      %s32 = ssub.s32 %s19, %s31
      %s33 = ssub.s32 %s20, %s27
      %s34 = sor.u32 %s32, %s33
      %p35 = scmp.eq.s32.totalorder %s34, 0
      %s37 = sadd.s32 %s36, 1
      %s38 = scalar_select %p35, %s36, %s37
      %p41 = pneg %p35
      %p42 = scmp.eq.s32.totalorder %s12, 1
      %p43 = por %p41, %p42
      %p44 = scmp.ne.s32.totalorder %s36, %s39
      %p45 = scmp.eq.s32.totalorder %s12, 0
      %p46 = por %p44, %p45
      %p47 = scmp.ne.s32.totalorder %s36, %s39
      %p48 = scmp.eq.s32.totalorder %s17, 1
      %p49 = por %p47, %p48
      %p50 = scmp.ne.s32.totalorder %s39, %s40
      %p51 = scmp.eq.s32.totalorder %s17, 0
      %p52 = por %p50, %p51
      %p53 = scmp.ne.s32.totalorder %s39, %s40
      %p54 = scmp.eq.s32.totalorder %s18, 1
      %p55 = por %p53, %p54
      %p57 = scmp.ne.s32.totalorder %s40, %s56
      %p58 = scmp.eq.s32.totalorder %s18, 0
      %p59 = por %p57, %p58
      %s61 = sadd.s32 %s60, 1
      %p64 = scmp.eq.s32.totalorder %s12, 1
      %p65 = scmp.ne.s32.totalorder %s60, %s62
      %p66 = scmp.eq.s32.totalorder %s12, 0
      %p67 = por %p65, %p66
      %p68 = scmp.ne.s32.totalorder %s60, %s62
      %p69 = scmp.eq.s32.totalorder %s17, 1
      %p70 = por %p68, %p69
      %p71 = scmp.ne.s32.totalorder %s62, %s63
      %p72 = scmp.eq.s32.totalorder %s17, 0
      %p73 = por %p71, %p72
      %p74 = scmp.ne.s32.totalorder %s62, %s63
      %p75 = scmp.eq.s32.totalorder %s18, 1
      %p76 = por %p74, %p75
      %p78 = scmp.ne.s32.totalorder %s63, %s77
      %p79 = scmp.eq.s32.totalorder %s18, 0
      %p80 = por %p78, %p79
      %s82 = sadd.s32 %s81, 1
      %p85 = scmp.eq.s32.totalorder %s12, 1
      %p86 = scmp.ne.s32.totalorder %s81, %s83
      %p87 = scmp.eq.s32.totalorder %s12, 0
      %p88 = por %p86, %p87
      %p89 = scmp.ne.s32.totalorder %s81, %s83
      %p90 = scmp.eq.s32.totalorder %s17, 1
      %p91 = por %p89, %p90
      %p92 = scmp.ne.s32.totalorder %s83, %s84
      %p93 = scmp.eq.s32.totalorder %s17, 0
      %p94 = por %p92, %p93
      %p95 = scmp.ne.s32.totalorder %s83, %s84
      %p96 = scmp.eq.s32.totalorder %s18, 1
      %p97 = por %p95, %p96
      %p99 = scmp.ne.s32.totalorder %s84, %s98
      %p100 = scmp.eq.s32.totalorder %s18, 0
      %p101 = por %p99, %p100
      %s102 = ssub.s32 %s19, %s31
      %s103 = ssub.s32 %s20, %s27
      %s104 = sor.u32 %s102, %s103
      %p105 = scmp.eq.s32.totalorder %s104, 0
      %s107 = sadd.s32 %s106, 1
      %s108 = scalar_select %p105, %s106, %s107
      %p111 = pneg %p105
      %p112 = scmp.eq.s32.totalorder %s12, 1
      %p113 = por %p111, %p112
      %p114 = scmp.ne.s32.totalorder %s106, %s109
      %p115 = scmp.eq.s32.totalorder %s12, 0
      %p116 = por %p114, %p115
      %p117 = scmp.ne.s32.totalorder %s106, %s109
      %p118 = scmp.eq.s32.totalorder %s17, 1
      %p119 = por %p117, %p118
      %p120 = scmp.ne.s32.totalorder %s109, %s110
      %p121 = scmp.eq.s32.totalorder %s17, 0
      %p122 = por %p120, %p121
      %p123 = scmp.ne.s32.totalorder %s109, %s110
      %p124 = scmp.eq.s32.totalorder %s18, 1
      %p125 = por %p123, %p124
      %p127 = scmp.ne.s32.totalorder %s110, %s126
      %p128 = scmp.eq.s32.totalorder %s18, 0
      %p129 = por %p127, %p128
      %p130 = scmp.le.s32.totalorder 1, %s12
      %p131 = scmp.lt.s32.totalorder %s12, 3
      %p132 = pnand %p130, %p131
      %p133 = pneg %p132
      // Predicated region
      $region9: #{tpu_custom_call.1} parent=5 // pred_check
        _
      $region10: #{tpu_custom_call.1} parent=5 // pred_check_branch
        %135 = sbr.rel (%p132) target = $region12
      $region11: #{tpu_custom_call.1} parent=5 // pred_region
        %s136 = ssub.s32 %s12, 1
        // Predicated region
        $region13: #{tpu_custom_call.1} parent=11 // pred_check
          %p137 = pneg %p73
        $region14: #{tpu_custom_call.1} parent=11 // pred_check_branch
          %139 = sbr.rel (%p137) target = $region16
        $region15: #{tpu_custom_call.1} parent=11 // pred_region
          _
        $region16: #{tpu_custom_call.1} parent=11 // pred_fallthru
          _
        // Predicated region
        $region17: #{tpu_custom_call.1} parent=11 // pred_check
          %p140 = pneg %p94
        $region18: #{tpu_custom_call.1} parent=11 // pred_check_branch
          %142 = sbr.rel (%p140) target = $region20
        $region19: #{tpu_custom_call.1} parent=11 // pred_region
          _
        $region20: #{tpu_custom_call.1} parent=11 // pred_fallthru
          _
      $region12: #{tpu_custom_call.1} parent=5 // pred_fallthru
        _
      %p143 = scmp.lt.s32.totalorder %s12, 2
      // Predicated region
      $region21: #{tpu_custom_call.1} parent=5 // pred_check
        %p144 = pneg %p143
      $region22: #{tpu_custom_call.1} parent=5 // pred_check_branch
        %146 = sbr.rel (%p144) target = $region24
      $region23: #{tpu_custom_call.1} parent=5 // pred_region
        // Predicated region
        $region25: #{tpu_custom_call.1} parent=23 // pred_check
          %p147 = pneg %p46
        $region26: #{tpu_custom_call.1} parent=23 // pred_check_branch
          %149 = sbr.rel (%p147) target = $region28
        $region27: #{tpu_custom_call.1} parent=23 // pred_region
          %s150 = smul.u32 2, %s20
          %p151 = scmp.lt.s32.totalorder %s19, 1
          %s152 = scalar_select %p151, %s19, 1
          %p153 = scmp.lt.s32.totalorder %s150, 1
          %s154 = scalar_select %p153, %s150, 1
          %s155 = smul.addr %s152, 8
          %s156 = sadd.s32 %s154, %s155
          %s157 = smul.addr %s156, 4
          %s158 = scalar_lea.vmem %s0, %s157
          %s159 = smul.u32 2, %s20
        $region28: #{tpu_custom_call.1} parent=23 // pred_fallthru
          _
      $region24: #{tpu_custom_call.1} parent=5 // pred_fallthru
        _
      %p160 = scmp.le.s32.totalorder 1, %s12
      %p161 = scmp.lt.s32.totalorder %s12, 3
      %p162 = pnand %p160, %p161
      %p163 = pneg %p162
      // Predicated region
      $region29: #{tpu_custom_call.1} parent=5 // pred_check
        _
      $region30: #{tpu_custom_call.1} parent=5 // pred_check_branch
        %165 = sbr.rel (%p162) target = $region32
      $region31: #{tpu_custom_call.1} parent=5 // pred_region
        %s166 = ssub.s32 %s12, 1
        %s167 = smul.u32 2, %s22
        %p168 = scmp.lt.s32.totalorder %s21, 1
        %s169 = scalar_select %p168, %s21, 1
        %p170 = scmp.lt.s32.totalorder %s167, 1
        %s171 = scalar_select %p170, %s167, 1
        %s172 = smul.addr %s169, 8
        %s173 = sadd.s32 %s171, %s172
        %s174 = smul.addr %s173, 4
        %s175 = scalar_lea.vmem %s0, %s174
        %p176 = pneg %p52
        %p177 = pneg %p49
        %p178 = pneg %p73
        %p179 = pneg %p70
        %p180 = pneg %p94
        %p181 = pneg %p91
        %p182 = pneg %p122
        %p183 = pneg %p119
        %s184 = sand.u32 %s109, 1
        %s185 = scalar_lea.sflag [#allocation3], %s184
        %s186 = sand.u32 %s109, 1
        %s187 = smul.addr %s186, 128
        %s188 = scalar_lea.vmem [#allocation2], %s187
        %s189 = smul.u32 2, %s22
        %p190 = scmp.lt.s32.totalorder %s21, 1
        %s191 = scalar_select %p190, %s21, 1
        %p192 = scmp.lt.s32.totalorder %s189, 1
        %s193 = scalar_select %p192, %s189, 1
        %s194 = smul.addr %s191, 8
        %s195 = sadd.s32 %s193, %s194
        %s196 = smul.addr %s195, 4
        %s197 = scalar_lea.vmem %s0, %s196
        %s198 = smul.u32 2, %s22
        %s199 = smul.u32 2, %s22
        %v201 = vld [vmem:[%s197] sm:$0xff]
        %v202 = vld [vmem:[%s197 + $0x8] sm:$0xff]
        %v203 = vld [vmem:[%s197 + $0x10] sm:$0xff]
        %v204 = vld [vmem:[%s197 + $0x18] sm:$0xff]
        %v205 = vld [vmem:[%s1] sm:$0xf]
        %v206 = vld [vmem:[%s1 + $0x4] sm:$0xf]
        %v207 = vld [vmem:[%s1 + $0x8] sm:$0xf]
        %v208 = vld [vmem:[%s1 + $0xc] sm:$0xf]
        %v209 = vld [vmem:[%s1 + $0x10] sm:$0xf]
        %v210 = vld [vmem:[%s1 + $0x14] sm:$0xf]
        %v211 = vld [vmem:[%s1 + $0x18] sm:$0xf]
        %v212 = vld [vmem:[%s1 + $0x1c] sm:$0xf]
        %v213 = vld [vmem:[%s1 + $0x20] sm:$0xf]
        %v214 = vld [vmem:[%s1 + $0x24] sm:$0xf]
        %v215 = vld [vmem:[%s1 + $0x28] sm:$0xf]
        %v216 = vld [vmem:[%s1 + $0x2c] sm:$0xf]
        %v217 = vld [vmem:[%s1 + $0x30] sm:$0xf]
        %v218 = vld [vmem:[%s1 + $0x34] sm:$0xf]
        %v219 = vld [vmem:[%s1 + $0x38] sm:$0xf]
        %v220 = vld [vmem:[%s1 + $0x3c] sm:$0xf]
        %v221 = vld [vmem:[%s2] sm:$0xff]
        %v222 = vld [vmem:[%s2 + $0x8] sm:$0xff]
        %v223 = vld [vmem:[%s2 + $0x10] sm:$0xff]
        %v224 = vld [vmem:[%s2 + $0x18] sm:$0xff]
        %v225 = vld [vmem:[%s2 + $0x20] sm:$0xff]
        %v226 = vld [vmem:[%s2 + $0x28] sm:$0xff]
        %v227 = vld [vmem:[%s2 + $0x30] sm:$0xff]
        %v228 = vld [vmem:[%s2 + $0x38] sm:$0xff]
        %v229 = vld [vmem:[%s2 + $0x40] sm:$0xff]
        %v230 = vld [vmem:[%s2 + $0x48] sm:$0xff]
        %v231 = vld [vmem:[%s2 + $0x50] sm:$0xff]
        %v232 = vld [vmem:[%s2 + $0x58] sm:$0xff]
        %v233 = vld [vmem:[%s2 + $0x60] sm:$0xff]
        %v234 = vld [vmem:[%s2 + $0x68] sm:$0xff]
        %v235 = vld [vmem:[%s2 + $0x70] sm:$0xff]
        %v236 = vld [vmem:[%s2 + $0x78] sm:$0xff]
        %238 = vset.pattern.permute.xlu0 0
        %239 = vperm.xlu0 %238, %v221
        %v240 = vpop.permute.xlu0 %239
        %243 = vset.pattern.permute.xlu0 0
        %244 = vperm.xlu0 %243, %v222
        %v245 = vpop.permute.xlu0 %244
        %248 = vset.pattern.permute.xlu0 0
        %249 = vperm.xlu0 %248, %v223
        %v250 = vpop.permute.xlu0 %249
        %253 = vset.pattern.permute.xlu0 0
        %254 = vperm.xlu0 %253, %v224
        %v255 = vpop.permute.xlu0 %254
        %258 = vset.pattern.permute.xlu0 0
        %259 = vperm.xlu0 %258, %v225
        %v260 = vpop.permute.xlu0 %259
        %263 = vset.pattern.permute.xlu0 0
        %264 = vperm.xlu0 %263, %v226
        %v265 = vpop.permute.xlu0 %264
        %268 = vset.pattern.permute.xlu0 0
        %269 = vperm.xlu0 %268, %v227
        %v270 = vpop.permute.xlu0 %269
        %273 = vset.pattern.permute.xlu0 0
        %274 = vperm.xlu0 %273, %v228
        %v275 = vpop.permute.xlu0 %274
        %278 = vset.pattern.permute.xlu0 0
        %279 = vperm.xlu0 %278, %v229
        %v280 = vpop.permute.xlu0 %279
        %283 = vset.pattern.permute.xlu0 0
        %284 = vperm.xlu0 %283, %v230
        %v285 = vpop.permute.xlu0 %284
        %288 = vset.pattern.permute.xlu0 0
        %289 = vperm.xlu0 %288, %v231
        %v290 = vpop.permute.xlu0 %289
        %293 = vset.pattern.permute.xlu0 0
        %294 = vperm.xlu0 %293, %v232
        %v295 = vpop.permute.xlu0 %294
        %298 = vset.pattern.permute.xlu0 0
        %299 = vperm.xlu0 %298, %v233
        %v300 = vpop.permute.xlu0 %299
        %303 = vset.pattern.permute.xlu0 0
        %304 = vperm.xlu0 %303, %v234
        %v305 = vpop.permute.xlu0 %304
        %308 = vset.pattern.permute.xlu0 0
        %309 = vperm.xlu0 %308, %v235
        %v310 = vpop.permute.xlu0 %309
        %313 = vset.pattern.permute.xlu0 0
        %314 = vperm.xlu0 %313, %v236
        %v315 = vpop.permute.xlu0 %314
        %v333 = vunpack.c.l.b16 %v205
        %v334 = vunpack.c.l.b16 %v206
        %v335 = vunpack.c.l.b16 %v207
        %v336 = vunpack.c.l.b16 %v208
        %v337 = vunpack.c.l.b16 %v209
        %v338 = vunpack.c.l.b16 %v210
        %v339 = vunpack.c.l.b16 %v211
        %v340 = vunpack.c.l.b16 %v212
        %v341 = vunpack.c.l.b16 %v213
        %v342 = vunpack.c.l.b16 %v214
        %v343 = vunpack.c.l.b16 %v215
        %v344 = vunpack.c.l.b16 %v216
        %v345 = vunpack.c.l.b16 %v217
        %v346 = vunpack.c.l.b16 %v218
        %v347 = vunpack.c.l.b16 %v219
        %v348 = vunpack.c.l.b16 %v220
        %v349 = vpack.c.b16 %v334, %v333
        %v350 = vpack.c.b16 %v336, %v335
        %v351 = vpack.c.b16 %v338, %v337
        %v352 = vpack.c.b16 %v340, %v339
        %v353 = vpack.c.b16 %v342, %v341
        %v354 = vpack.c.b16 %v344, %v343
        %v355 = vpack.c.b16 %v346, %v345
        %v356 = vpack.c.b16 %v348, %v347
        %v361 = vunpack.c.l.b16 %v201
        %v362 = vunpack.c.h.b16 %v201
        %v363 = vunpack.c.l.b16 %v202
        %v364 = vunpack.c.h.b16 %v202
        %v365 = vunpack.c.l.b16 %v203
        %v366 = vunpack.c.h.b16 %v203
        %v367 = vunpack.c.l.b16 %v204
        %v368 = vunpack.c.h.b16 %v204
        %v369 = vpack.c.b16 %v363, %v361
        %v370 = vpack.c.b16 %v364, %v362
        %v371 = vpack.c.b16 %v367, %v365
        %v372 = vpack.c.b16 %v368, %v366
        %vm377 = vcmask 261120
        %v379 = vsel %vm377, %v349, 0
        %v382 = vsel %vm377, %v350, 0
        %v385 = vsel %vm377, %v351, 0
        %v388 = vsel %vm377, %v352, 0
        %v391 = vsel %vm377, %v353, 0
        %v394 = vsel %vm377, %v354, 0
        %v397 = vsel %vm377, %v355, 0
        %v400 = vsel %vm377, %v356, 0
        %402 = vmatpush.bf16.msra.mxu0 0
        %403 = vmatpush.bf16.msra.mxu0 0
        %404 = vmatpush.bf16.msra.mxu0 0
        %405 = vmatpush.bf16.msra.mxu0 0
        %406 = vmatpush.bf16.msra.mxu0 0
        %407 = vmatpush.bf16.msra.mxu0 0
        %408 = vmatpush.bf16.msra.mxu0 %v371
        %409 = vmatpush.bf16.msra.mxu0 %v369
        %410 = vmatmul.bf16.gmra.mxu0 %v379
        %v411 = vpop.f32.mrf.mxu0
        %v412 = vadd.f32 %v240, %v411
        %v413 = vpop.f32.mrf.mxu0
        %v414 = vadd.f32 %v245, %v413
        %415 = vmatmul.bf16.gmra.mxu0 %v382
        %v416 = vpop.f32.mrf.mxu0
        %v417 = vadd.f32 %v250, %v416
        %v418 = vpop.f32.mrf.mxu0
        %v419 = vadd.f32 %v255, %v418
        %420 = vmatmul.bf16.gmra.mxu0 %v385
        %v421 = vpop.f32.mrf.mxu0
        %v422 = vadd.f32 %v260, %v421
        %v423 = vpop.f32.mrf.mxu0
        %v424 = vadd.f32 %v265, %v423
        %425 = vmatmul.bf16.gmra.mxu0 %v388
        %v426 = vpop.f32.mrf.mxu0
        %v427 = vadd.f32 %v270, %v426
        %v428 = vpop.f32.mrf.mxu0
        %v429 = vadd.f32 %v275, %v428
        %430 = vmatmul.bf16.gmra.mxu0 %v391
        %v431 = vpop.f32.mrf.mxu0
        %v432 = vadd.f32 %v280, %v431
        %v433 = vpop.f32.mrf.mxu0
        %v434 = vadd.f32 %v285, %v433
        %435 = vmatmul.bf16.gmra.mxu0 %v394
        %v436 = vpop.f32.mrf.mxu0
        %v437 = vadd.f32 %v290, %v436
        %v438 = vpop.f32.mrf.mxu0
        %v439 = vadd.f32 %v295, %v438
        %440 = vmatmul.bf16.gmra.mxu0 %v397
        %v441 = vpop.f32.mrf.mxu0
        %v442 = vadd.f32 %v300, %v441
        %v443 = vpop.f32.mrf.mxu0
        %v444 = vadd.f32 %v305, %v443
        %445 = vmatmul.bf16.gmra.mxu0 %v400
        %v446 = vpop.f32.mrf.mxu0
        %v447 = vadd.f32 %v310, %v446
        %v448 = vpop.f32.mrf.mxu0
        %v449 = vadd.f32 %v315, %v448
        %450 = vdwg.mxu0
        %451 = vmatpush.bf16.msra.mxu0 0
        %452 = vmatpush.bf16.msra.mxu0 0
        %453 = vmatpush.bf16.msra.mxu0 0
        %454 = vmatpush.bf16.msra.mxu0 0
        %455 = vmatpush.bf16.msra.mxu0 0
        %456 = vmatpush.bf16.msra.mxu0 0
        %457 = vmatpush.bf16.msra.mxu0 %v372
        %458 = vmatpush.bf16.msra.mxu0 %v370
        %459 = vmatmul.bf16.gmra.mxu0 %v379
        %v460 = vpop.f32.mrf.mxu0
        %v461 = vadd.f32 %v240, %v460
        %v462 = vpop.f32.mrf.mxu0
        %v463 = vadd.f32 %v245, %v462
        %464 = vmatmul.bf16.gmra.mxu0 %v382
        %v465 = vpop.f32.mrf.mxu0
        %v466 = vadd.f32 %v250, %v465
        %v467 = vpop.f32.mrf.mxu0
        %v468 = vadd.f32 %v255, %v467
        %469 = vmatmul.bf16.gmra.mxu0 %v385
        %v470 = vpop.f32.mrf.mxu0
        %v471 = vadd.f32 %v260, %v470
        %v472 = vpop.f32.mrf.mxu0
        %v473 = vadd.f32 %v265, %v472
        %474 = vmatmul.bf16.gmra.mxu0 %v388
        %v475 = vpop.f32.mrf.mxu0
        %v476 = vadd.f32 %v270, %v475
        %v477 = vpop.f32.mrf.mxu0
        %v478 = vadd.f32 %v275, %v477
        %479 = vmatmul.bf16.gmra.mxu0 %v391
        %v480 = vpop.f32.mrf.mxu0
        %v481 = vadd.f32 %v280, %v480
        %v482 = vpop.f32.mrf.mxu0
        %v483 = vadd.f32 %v285, %v482
        %484 = vmatmul.bf16.gmra.mxu0 %v394
        %v485 = vpop.f32.mrf.mxu0
        %v486 = vadd.f32 %v290, %v485
        %v487 = vpop.f32.mrf.mxu0
        %v488 = vadd.f32 %v295, %v487
        %489 = vmatmul.bf16.gmra.mxu0 %v397
        %v490 = vpop.f32.mrf.mxu0
        %v491 = vadd.f32 %v300, %v490
        %v492 = vpop.f32.mrf.mxu0
        %v493 = vadd.f32 %v305, %v492
        %494 = vmatmul.bf16.gmra.mxu0 %v400
        %v495 = vpop.f32.mrf.mxu0
        %v496 = vadd.f32 %v310, %v495
        %v497 = vpop.f32.mrf.mxu0
        %v498 = vadd.f32 %v315, %v497
        %499 = vdwg.mxu0
        %v500 = vmax.f32 %v412, 0.0
        %v501 = vmax.f32 %v461, 0.0
        %v502 = vmax.f32 %v414, 0.0
        %v503 = vmax.f32 %v463, 0.0
        %v504 = vmax.f32 %v417, 0.0
        %v505 = vmax.f32 %v466, 0.0
        %v506 = vmax.f32 %v419, 0.0
        %v507 = vmax.f32 %v468, 0.0
        %v508 = vmax.f32 %v422, 0.0
        %v509 = vmax.f32 %v471, 0.0
        %v510 = vmax.f32 %v424, 0.0
        %v511 = vmax.f32 %v473, 0.0
        %v512 = vmax.f32 %v427, 0.0
        %v513 = vmax.f32 %v476, 0.0
        %v514 = vmax.f32 %v429, 0.0
        %v515 = vmax.f32 %v478, 0.0
        %v516 = vmax.f32 %v432, 0.0
        %v517 = vmax.f32 %v481, 0.0
        %v518 = vmax.f32 %v434, 0.0
        %v519 = vmax.f32 %v483, 0.0
        %v520 = vmax.f32 %v437, 0.0
        %v521 = vmax.f32 %v486, 0.0
        %v522 = vmax.f32 %v439, 0.0
        %v523 = vmax.f32 %v488, 0.0
        %v524 = vmax.f32 %v442, 0.0
        %v525 = vmax.f32 %v491, 0.0
        %v526 = vmax.f32 %v444, 0.0
        %v527 = vmax.f32 %v493, 0.0
        %v528 = vmax.f32 %v447, 0.0
        %v529 = vmax.f32 %v496, 0.0
        %v530 = vmax.f32 %v449, 0.0
        %v531 = vmax.f32 %v498, 0.0
        %v532 = vpack.c.bf16 %v501, %v500
        %v533 = vpack.c.bf16 %v503, %v502
        %v534 = vpack.c.bf16 %v505, %v504
        %v535 = vpack.c.bf16 %v507, %v506
        %v536 = vpack.c.bf16 %v509, %v508
        %v537 = vpack.c.bf16 %v511, %v510
        %v538 = vpack.c.bf16 %v513, %v512
        %v539 = vpack.c.bf16 %v515, %v514
        %v540 = vpack.c.bf16 %v517, %v516
        %v541 = vpack.c.bf16 %v519, %v518
        %v542 = vpack.c.bf16 %v521, %v520
        %v543 = vpack.c.bf16 %v523, %v522
        %v544 = vpack.c.bf16 %v525, %v524
        %v545 = vpack.c.bf16 %v527, %v526
        %v546 = vpack.c.bf16 %v529, %v528
        %v547 = vpack.c.bf16 %v531, %v530
        %548 = vst [vmem:[%s188] sm:$0xff] %v532
        %549 = vst [vmem:[%s188 + $0x8] sm:$0xff] %v533
        %550 = vst [vmem:[%s188 + $0x10] sm:$0xff] %v534
        %551 = vst [vmem:[%s188 + $0x18] sm:$0xff] %v535
        %552 = vst [vmem:[%s188 + $0x20] sm:$0xff] %v536
        %553 = vst [vmem:[%s188 + $0x28] sm:$0xff] %v537
        %554 = vst [vmem:[%s188 + $0x30] sm:$0xff] %v538
        %555 = vst [vmem:[%s188 + $0x38] sm:$0xff] %v539
        %556 = vst [vmem:[%s188 + $0x40] sm:$0xff] %v540
        %557 = vst [vmem:[%s188 + $0x48] sm:$0xff] %v541
        %558 = vst [vmem:[%s188 + $0x50] sm:$0xff] %v542
        %559 = vst [vmem:[%s188 + $0x58] sm:$0xff] %v543
        %560 = vst [vmem:[%s188 + $0x60] sm:$0xff] %v544
        %561 = vst [vmem:[%s188 + $0x68] sm:$0xff] %v545
        %562 = vst [vmem:[%s188 + $0x70] sm:$0xff] %v546
        %563 = vst [vmem:[%s188 + $0x78] sm:$0xff] %v547
        %s564 = sand.u32 %s109, 1
        %s565 = scalar_lea.sflag [#allocation3], %s564
        %s566 = sand.u32 %s109, 1
        %s567 = smul.addr %s566, 128
        %s568 = scalar_lea.vmem [#allocation2], %s567
        // Predicated region
        $region33: #{tpu_custom_call.1} parent=31 // pred_check
          %p569 = pneg %p119
        $region34: #{tpu_custom_call.1} parent=31 // pred_check_branch
          %571 = sbr.rel (%p569) target = $region36
        $region35: #{tpu_custom_call.1} parent=31 // pred_region
          %s572 = smul.u32 2, %s22
          %574 = vsyncadd %s565, 0
          %s575 = smul.addr %s21, 32
          %s576 = sadd.s32 %s572, %s575
          %s577 = smul.addr %s576, 4
          %s578 = scalar_lea.hbm %s3, %s577
          %s579 = sshll.u32 %s568, 4
          %s580 = int_to_ptr.vmem [resolvable:$true] %s579
          %s581 = sshll.u32 %s578, 4
          %s582 = int_to_ptr.hbm [resolvable:$true] %s581
          %587 = dma.vmem_to_hbm [thread:$0]  %s580, 2048, %s582, %s565, 128, 128, 8
        $region36: #{tpu_custom_call.1} parent=31 // pred_fallthru
          _
      $region32: #{tpu_custom_call.1} parent=5 // pred_fallthru
        _
      %p588 = scmp.le.s32.totalorder 2, %s12
      // Predicated region
      $region37: #{tpu_custom_call.1} parent=5 // pred_check
        %p589 = pneg %p588
      $region38: #{tpu_custom_call.1} parent=5 // pred_check_branch
        %591 = sbr.rel (%p589) target = $region40
      $region39: #{tpu_custom_call.1} parent=5 // pred_region
        %s592 = ssub.s32 %s12, 2
        // Predicated region
        $region41: #{tpu_custom_call.1} parent=39 // pred_check
          %p593 = pneg %p125
        $region42: #{tpu_custom_call.1} parent=39 // pred_check_branch
          %595 = sbr.rel (%p593) target = $region44
        $region43: #{tpu_custom_call.1} parent=39 // pred_region
          %s596 = sand.u32 %s110, 1
          %s597 = scalar_lea.sflag [#allocation3], %s596
          %s598 = sand.u32 %s110, 1
          %s599 = smul.addr %s598, 128
          %s600 = scalar_lea.vmem [#allocation2], %s599
          %602 = dma.done %s597, 2048
        $region44: #{tpu_custom_call.1} parent=39 // pred_fallthru
          _
      $region40: #{tpu_custom_call.1} parent=5 // pred_fallthru
        _
    $region6: #{tpu_custom_call.1} parent=1 // loop_footer
      %s16 = sadd.s32 1, %s12
    $region7: #{tpu_custom_call.1} parent=1 // loop_footer_branch
      %11 = sbr.rel target = $region3
    $region8: #{tpu_custom_call.1} parent=1 // loop_exit
      _
    %603 = vsyncpa [#allocation3], 1
    %s604 = scalar_lea.sflag [#allocation3], 1
    %605 = vsyncpa %s604, 1

</llo_original>
